<compile_context>
chip_gen: v5e
topology: v5e:2x2
jax: 0.10.0
libtpu: 0.0.40
codegen_flags: <defaults>
</compile_context>

<pallas_src>
import collections
import functools

import jax
import jax.numpy as jnp
from jax import lax
from jax.experimental import pallas as pl
from jax.experimental.pallas import tpu as pltpu

EPS = 1e-5  # nn.LayerNorm default

_HWConfig = collections.namedtuple("_HWConfig", ["tm", "scatter_vmem", "fuse_vmem"])


def _round_up(x, m):
    return ((x + m - 1) // m) * m


@functools.lru_cache(maxsize=1)
def _hw_config():
    """Generation-aware defaults: v7x has 64 MiB VMEM/TC, v5e/v6e have 128 MiB."""
    vmem_cap = None
    try:
        vmem_cap = int(pltpu.get_tpu_info().vmem_capacity_bytes)
    except Exception:
        vmem_cap = None
    if vmem_cap is None:
        try:
            kind = jax.devices()[0].device_kind.lower()
        except Exception:
            kind = ""
        vmem_cap = (64 << 20) if ("v7" in kind or "tpu7" in kind) else (128 << 20)
    small_vmem = vmem_cap <= (64 << 20)
    return _HWConfig(
        tm=512 if small_vmem else 1024,
        scatter_vmem=(40 << 20) if small_vmem else (64 << 20),
        fuse_vmem=(48 << 20) if small_vmem else (80 << 20),
    )


def _layernorm(x, g, b):
    mu = jnp.mean(x, axis=-1, keepdims=True)
    xc = x - mu
    var = jnp.mean(xc * xc, axis=-1, keepdims=True)
    return xc * jax.lax.rsqrt(var + EPS) * g + b


def _gelu(x):
    # exact (erf) GELU == torch.nn.GELU(approximate='none')
    return 0.5 * x * (1.0 + jax.lax.erf(x * 0.7071067811865476))


def _bf16_dot(a, w_bf16):
    # bf16 MXU operands, f32 accumulation.
    return jnp.dot(a.astype(jnp.bfloat16), w_bf16, preferred_element_type=jnp.float32)


# --------------------------------------------------------------------------
# Kernel 1: fuse_fn on the packed class-token rows only (Mp x D, tiny).
# --------------------------------------------------------------------------
def fuse_rows_kernel(p_ref, id_ref,
                     g1p_ref, b1p_ref, g1i_ref, b1i_ref,
                     w11p_ref, w11i_ref, b11_ref,
                     w12_ref, b12_ref,
                     g2_ref, b2_ref,
                     w21_ref, b21_ref,
                     w22_ref, b22_ref,
                     gf_ref, bf_ref,
                     out_ref):
    p = p_ref[...].astype(jnp.float32)      # (Mp, D) packed class-token prompt rows
    i = id_ref[...].astype(jnp.float32)     # (Mp, D) paired id embeds

    # LayerNorm over the virtual concat [p, i] (width 2D) WITHOUT materialising it.
    mean = 0.5 * (jnp.mean(p, axis=-1, keepdims=True) +
                  jnp.mean(i, axis=-1, keepdims=True))
    pc = p - mean
    ic = i - mean
    var = 0.5 * (jnp.mean(pc * pc, axis=-1, keepdims=True) +
                 jnp.mean(ic * ic, axis=-1, keepdims=True))
    inv = jax.lax.rsqrt(var + EPS)
    hp = pc * inv * g1p_ref[...] + b1p_ref[...]
    hi = ic * inv * g1i_ref[...] + b1i_ref[...]

    # MLP1 (no residual): fc1 split into its (D,D) halves; then "+ prompt".
    h = _bf16_dot(hp, w11p_ref[...]) + _bf16_dot(hi, w11i_ref[...]) + b11_ref[...]
    h = _gelu(h)
    h = _bf16_dot(h, w12_ref[...]) + b12_ref[...]
    s = h + p

    # MLP2 (residual): LN -> fc1 -> GELU -> fc2 -> + residual.
    h2 = _layernorm(s, g2_ref[...], b2_ref[...])
    h2 = _bf16_dot(h2, w21_ref[...]) + b21_ref[...]
    h2 = _gelu(h2)
    h2 = _bf16_dot(h2, w22_ref[...]) + b22_ref[...]
    s2 = h2 + s

    # Final LayerNorm.
    out_ref[...] = _layernorm(s2, gf_ref[...], bf_ref[...]).astype(out_ref.dtype)


def _fuse_rows(p_pack, id_pack, pp, out_dtype, vmem_limit):
    Mp, D = p_pack.shape
    args = (p_pack, id_pack,
            pp["g1p"], pp["b1p"], pp["g1i"], pp["b1i"],
            pp["w11p"], pp["w11i"], pp["b11"],
            pp["w12"], pp["b12"],
            pp["ln2_g"], pp["ln2_b"],
            pp["w21"], pp["b21"],
            pp["w22"], pp["b22"],
            pp["lnf_g"], pp["lnf_b"])
    # Single invocation: whole arrays live in VMEM, weights read once, no
    # grid-level double buffering.
    # TODO(synk): for D large enough that 5*D^2 bf16 weights exceed the VMEM
    # limit, tile the output-column axis with an "arbitrary" grid instead.
    return pl.pallas_call(
        fuse_rows_kernel,
        out_shape=jax.ShapeDtypeStruct((Mp, D), out_dtype),
        compiler_params=pltpu.CompilerParams(vmem_limit_bytes=vmem_limit),
    )(*args)


# --------------------------------------------------------------------------
# Kernel 2: masked scatter of the fused rows back into the prompt stream.
# --------------------------------------------------------------------------
def scatter_kernel(rank_ref, p_ref, fused_ref, out_ref, *, sub):
    mp = fused_ref.shape[0]
    n_sub = p_ref.shape[0] // sub

    def chunk(s, carry):
        r0 = s * sub
        rank = rank_ref[pl.ds(r0, sub), :]        # (sub, 1) int32, -1 = keep prompt
        p = p_ref[pl.ds(r0, sub), :]              # (sub, D)
        onehot = (rank == lax.broadcasted_iota(jnp.int32, (sub, mp), 1))
        # Gather via one-hot matmul on the MXU (exact, prompt dtype operands).
        gathered = jnp.dot(onehot.astype(fused_ref.dtype), fused_ref[...],
                           preferred_element_type=jnp.float32)
        out_ref[pl.ds(r0, sub), :] = jnp.where(
            rank >= 0, gathered.astype(out_ref.dtype), p)
        return carry

    # Chunked to bound vreg live ranges at large row tiles.
    lax.fori_loop(0, n_sub, chunk, 0, unroll=True)


# --------------------------------------------------------------------------
# Parameters
# --------------------------------------------------------------------------
def init_params(key, embed_dim):
    """Raw (torch-layout) f32 parameters."""
    D = embed_dim
    ks = jax.random.split(key, 8)

    def w(k, shape):
        return (0.02 * jax.random.normal(k, shape)).astype(jnp.float32)

    return dict(
        ln1_g=jnp.ones((1, 2 * D), jnp.float32), ln1_b=jnp.zeros((1, 2 * D), jnp.float32),
        w11=w(ks[0], (2 * D, D)), b11=w(ks[1], (1, D)),
        w12=w(ks[2], (D, D)),     b12=w(ks[3], (1, D)),
        ln2_g=jnp.ones((1, D), jnp.float32), ln2_b=jnp.zeros((1, D), jnp.float32),
        w21=w(ks[4], (D, D)),     b21=w(ks[5], (1, D)),
        w22=w(ks[6], (D, D)),     b22=w(ks[7], (1, D)),
        lnf_g=jnp.ones((1, D), jnp.float32), lnf_b=jnp.zeros((1, D), jnp.float32),
    )


def prepare_params(params):
    """One-shot: cast matmul weights to bf16 and pre-split fc1 -- hoisted out of
    the per-call forward so the forward never re-casts weights."""
    D = params["w12"].shape[0]
    w11 = params["w11"].astype(jnp.bfloat16)

    def f32(k):
        return params[k].astype(jnp.float32)

    def bf(k):
        return params[k].astype(jnp.bfloat16)

    return dict(
        g1p=f32("ln1_g")[:, :D], b1p=f32("ln1_b")[:, :D],
        g1i=f32("ln1_g")[:, D:], b1i=f32("ln1_b")[:, D:],
        w11p=w11[:D, :], w11i=w11[D:, :], b11=f32("b11"),
        w12=bf("w12"), b12=f32("b12"),
        ln2_g=f32("ln2_g"), ln2_b=f32("ln2_b"),
        w21=bf("w21"), b21=f32("b21"),
        w22=bf("w22"), b22=f32("b22"),
        lnf_g=f32("lnf_g"), lnf_b=f32("lnf_b"),
    )


# --------------------------------------------------------------------------
# Forward
# --------------------------------------------------------------------------
@functools.partial(jax.jit, static_argnames=("tm", "scatter_vmem", "fuse_vmem"))
def _forward_impl(prompt_embeds, id_embeds, class_tokens_mask, prepared_params,
                  *, tm, scatter_vmem, fuse_vmem):
    B, S, D = prompt_embeds.shape
    N = B * S

    p_flat = prompt_embeds.reshape(N, D)
    id_flat = id_embeds.astype(prompt_embeds.dtype).reshape(-1, D)   # (M, D), id batch == 1
    M = id_flat.shape[0]
    Mp = max(8, _round_up(M, 8))
    if Mp != M:
        id_flat = jnp.pad(id_flat, ((0, Mp - M), (0, 0)))            # tiny, negligible

    mask_flat = class_tokens_mask.reshape(N)
    # rank[j] = index of class token j among all class tokens (== paired id row),
    # -1 otherwise.  Clipped to the last id row (the torch module asserts the
    # counts match; out-of-contract extra class tokens replicate the last id).
    csum = jnp.cumsum(mask_flat.astype(jnp.int32)) - 1
    rank = jnp.where(mask_flat, jnp.minimum(csum, M - 1), -1).astype(jnp.int32)

    # Pack the class-token prompt rows to the front (static size Mp); row j
    # pairs with id row j -- same ordering as torch masked_select / masked_scatter_.
    # NOTE: silently truncates if more than Mp class tokens are present.
    cls_pos = jnp.nonzero(mask_flat, size=Mp, fill_value=0)[0]
    p_pack = jnp.take(p_flat, cls_pos, axis=0)                        # (Mp, D)

    fused = _fuse_rows(p_pack, id_flat, prepared_params,
                       prompt_embeds.dtype, fuse_vmem)                # (Mp, D) prompt dtype

    # Row tile: at least 2 tiles when N >= 16 (v7x megacore), multiple of 256
    # above 256 so the in-kernel sub-chunk loop divides evenly.  No wrapper-side
    # pad / slice: the last tile may be ragged (safe: tail rows are never stored).
    tm_eff = min(tm, max(8, _round_up(pl.cdiv(N, 2), 8)))
    if tm_eff > 256:
        tm_eff = (tm_eff // 256) * 256
    sub = min(tm_eff, 256)
    n_tiles = pl.cdiv(N, tm_eff)

    itemsize = jnp.dtype(prompt_embeds.dtype).itemsize
    cost = pl.CostEstimate(
        flops=2 * N * Mp * D,
        transcendentals=0,
        bytes_accessed=2 * N * D * itemsize + N * 4 + Mp * D * itemsize)

    out_flat = pl.pallas_call(
        functools.partial(scatter_kernel, sub=sub),
        out_shape=jax.ShapeDtypeStruct((N, D), prompt_embeds.dtype),
        grid=(n_tiles,),
        in_specs=[pl.BlockSpec((tm_eff, 1), lambda i: (i, 0)),    # per-row rank (int32)
                  pl.BlockSpec((tm_eff, D), lambda i: (i, 0)),    # prompt rows
                  pl.BlockSpec((Mp, D), lambda i: (0, 0))],       # fused table (grid-invariant)
        out_specs=pl.BlockSpec((tm_eff, D), lambda i: (i, 0)),
        compiler_params=pltpu.CompilerParams(
            dimension_semantics=("parallel",),
            vmem_limit_bytes=scatter_vmem),
        cost_estimate=cost,
    )(rank.reshape(N, 1), p_flat, fused)

    return out_flat.reshape(B, S, D)


def fuse_module_forward(prompt_embeds, id_embeds, class_tokens_mask, prepared_params, tm=None):
    cfg = _hw_config()
    return _forward_impl(prompt_embeds, id_embeds, class_tokens_mask, prepared_params,
                         tm=int(tm) if tm is not None else cfg.tm,
                         scatter_vmem=cfg.scatter_vmem,
                         fuse_vmem=cfg.fuse_vmem)


# --------------------------------------------------------------------------
# Pure-JAX references (torch-faithful; optional bf16 MXU-operand matching)
# --------------------------------------------------------------------------
def ref_forward(prompt_embeds, id_embeds, class_tokens_mask, params, bf16_dots=True):
    B, S, D = prompt_embeds.shape
    N = B * S

    def dot(a, b):
        if bf16_dots:
            return jnp.dot(a.astype(jnp.bfloat16), b.astype(jnp.bfloat16),
                           preferred_element_type=jnp.float32)
        return jnp.dot(a, b)

    p = prompt_embeds.reshape(N, D).astype(jnp.float32)
    idf = id_embeds.reshape(-1, D).astype(jnp.float32)
    mask = class_tokens_mask.reshape(N)
    rank = jnp.clip(jnp.cumsum(mask.astype(jnp.int32)) - 1, 0, idf.shape[0] - 1)
    i = jnp.take(idf, rank, axis=0)

    x = jnp.concatenate([p, i], axis=-1)
    h = _layernorm(x, params["ln1_g"], params["ln1_b"])
    h = dot(_gelu(dot(h, params["w11"]) + params["b11"]), params["w12"]) + params["b12"]
    s = h + p
    h2 = _layernorm(s, params["ln2_g"], params["ln2_b"])
    h2 = dot(_gelu(dot(h2, params["w21"]) + params["b21"]), params["w22"]) + params["b22"]
    s2 = h2 + s
    fused = _layernorm(s2, params["lnf_g"], params["lnf_b"])
    out = jnp.where(mask[:, None], fused, p)
    return out.reshape(B, S, D).astype(prompt_embeds.dtype)


def _check(out, prompt_embeds, id_embeds, class_tokens_mask, raw_params):
    ref_bf16 = ref_forward(prompt_embeds, id_embeds, class_tokens_mask, raw_params, bf16_dots=True)
    err = float(jnp.max(jnp.abs(out - ref_bf16)))
    assert jnp.allclose(out, ref_bf16, atol=2e-3, rtol=2e-3), f"max abs err (bf16 ref) = {err}"

    ref_f32 = ref_forward(prompt_embeds, id_embeds, class_tokens_mask, raw_params, bf16_dots=False)
    err32 = float(jnp.max(jnp.abs(out - ref_f32)))
    assert jnp.allclose(out, ref_f32, atol=1e-2, rtol=1e-2), f"max abs err (f32 ref) = {err32}"

    # Non-class rows must pass through bit-exactly (pure copy path in the kernel).
    keep = jnp.logical_not(class_tokens_mask)[..., None]
    assert bool(jnp.all(jnp.where(keep, out == prompt_embeds, True)))


if __name__ == "__main__":
    key = jax.random.PRNGKey(0)
    k_p, k_id, k_w, k_p2 = jax.random.split(key, 4)

    D = 64                       # embed_dim
    max_num_inputs = 8           # id_embeds: [1, max_num_inputs, 1, D]
    raw_params = init_params(k_w, D)
    params = prepare_params(raw_params)   # one-shot bf16 weight prep (hoisted out of forward)

    # ---- test 1: tile divides the row count exactly ----
    B, S = 2, 16
    prompt_embeds = jax.random.normal(k_p, (B, S, D), dtype=jnp.float32)
    id_embeds = jax.random.normal(k_id, (1, max_num_inputs, 1, D), dtype=jnp.float32)
    class_tokens_mask = jnp.zeros((B, S), dtype=bool)
    class_tokens_mask = class_tokens_mask.at[0, jnp.array([0, 3, 7])].set(True)
    class_tokens_mask = class_tokens_mask.at[1, jnp.array([2, 5, 9])].set(True)

    out = fuse_module_forward(prompt_embeds, id_embeds, class_tokens_mask, params)
    out = jax.block_until_ready(out)
    assert out.shape == (B, S, D)
    _check(out, prompt_embeds, id_embeds, class_tokens_mask, raw_params)

    # ---- test 2: ragged last row tile (N % tm != 0), no wrapper pad/slice ----
    B2, S2 = 2, 13
    prompt2 = jax.random.normal(k_p2, (B2, S2, D), dtype=jnp.float32)
    mask2 = jnp.zeros((B2, S2), dtype=bool)
    mask2 = mask2.at[0, jnp.array([1, 6])].set(True)
    mask2 = mask2.at[1, jnp.array([0, 4, 12])].set(True)

    out2 = fuse_module_forward(prompt2, id_embeds, mask2, params)
    out2 = jax.block_until_ready(out2)
    assert out2.shape == (B2, S2, D)
    _check(out2, prompt2, id_embeds, mask2, raw_params)

    print("KERNEL_OK")
</pallas_src>

<mosaic_0001>
module attributes {stable_mosaic.version = 11 : i64} {
  func.func @scatter_kernel(%arg0: i32, %arg1: memref<16x1xi32, #tpu.memory_space<vmem>>, %arg2: memref<16x64xf32, #tpu.memory_space<vmem>>, %arg3: memref<8x64xf32, #tpu.memory_space<vmem>>, %arg4: memref<16x64xf32, #tpu.memory_space<vmem>>) attributes {dimension_semantics = [#tpu.dimension_semantics<parallel>], iteration_bounds = array<i64: 2>, scalar_prefetch = 0 : i64, scratch_operands = 0 : i64, tpu.core_type = #tpu.core_type<tc>, window_params = [{transform_indices = @transform_0, window_bounds = array<i64: 16, 1>}, {transform_indices = @transform_1, window_bounds = array<i64: 16, 64>}, {pipeline_mode = #tpu.pipeline_mode<synchronous>, transform_indices = @transform_2, window_bounds = array<i64: 8, 64>}, {transform_indices = @transform_3, window_bounds = array<i64: 16, 64>}]} {
    %c0_i32 = arith.constant 0 : i32
    %c16_i32 = arith.constant 16 : i32
    %0 = arith.muli %c0_i32, %c16_i32 : i32
    %1 = arith.index_cast %0 : i32 to index
    %c0 = arith.constant 0 : index
    %2 = vector.load %arg1[%1, %c0] : memref<16x1xi32, #tpu.memory_space<vmem>>, vector<16x1xi32>
    %3 = arith.index_cast %0 : i32 to index
    %c0_0 = arith.constant 0 : index
    %4 = vector.load %arg2[%3, %c0_0] : memref<16x64xf32, #tpu.memory_space<vmem>>, vector<16x64xf32>
    %5 = tpu.iota {dimensions = array<i32: 1>} : vector<16x8xi32>
    %6 = vector.broadcast %2 : vector<16x1xi32> to vector<16x8xi32>
    %7 = arith.cmpi eq, %6, %5 : vector<16x8xi32>
    %8 = arith.extui %7 : vector<16x8xi1> to vector<16x8xi32>
    %9 = arith.sitofp %8 : vector<16x8xi32> to vector<16x8xf32>
    %c0_1 = arith.constant 0 : index
    %c0_2 = arith.constant 0 : index
    %10 = vector.load %arg3[%c0_1, %c0_2] : memref<8x64xf32, #tpu.memory_space<vmem>>, vector<8x64xf32>
    %cst = arith.constant dense<0.000000e+00> : vector<16x64xf32>
    %11 = tpu.matmul %9, %10, %cst {dimension_numbers = #tpu.dot_dimension_numbers<[1], [0], [0], [1], [0, 0, 1, 1], [], []>} : vector<16x8xf32>, vector<8x64xf32>, vector<16x64xf32> -> vector<16x64xf32>
    %c0_i32_3 = arith.constant 0 : i32
    %12 = vector.broadcast %c0_i32_3 : i32 to vector<16x1xi32>
    %13 = arith.cmpi sge, %2, %12 : vector<16x1xi32>
    %14 = vector.shape_cast %13 : vector<16x1xi1> to vector<16x1xi1>
    %15 = vector.broadcast %14 : vector<16x1xi1> to vector<16x64xi1>
    %16 = arith.select %15, %11, %4 : vector<16x64xi1>, vector<16x64xf32>
    %17 = arith.index_cast %0 : i32 to index
    %c0_4 = arith.constant 0 : index
    %18 = vector.load %arg4[%17, %c0_4] : memref<16x64xf32, #tpu.memory_space<vmem>>, vector<16x64xf32>
    tpu.vector_store %arg4[%17, %c0_4], %16 {strides = array<i32>} : memref<16x64xf32, #tpu.memory_space<vmem>>, vector<16x64xf32>,
    %c1_i32 = arith.constant 1 : i32
    return
  }
  func.func @transform_0(%arg0: i32) -> (i32, i32) {
    %c0_i32 = arith.constant 0 : i32
    %c0_i32_0 = arith.constant 0 : i32
    return %arg0, %c0_i32 : i32, i32
  }
  func.func @transform_1(%arg0: i32) -> (i32, i32) {
    %c0_i32 = arith.constant 0 : i32
    %c0_i32_0 = arith.constant 0 : i32
    return %arg0, %c0_i32 : i32, i32
  }
  func.func @transform_2(%arg0: i32) -> (i32, i32) {
    %c0_i32 = arith.constant 0 : i32
    %c0_i32_0 = arith.constant 0 : i32
    %c0_i32_1 = arith.constant 0 : i32
    return %c0_i32, %c0_i32_0 : i32, i32
  }
  func.func @transform_3(%arg0: i32) -> (i32, i32) {
    %c0_i32 = arith.constant 0 : i32
    %c0_i32_0 = arith.constant 0 : i32
    return %arg0, %c0_i32 : i32, i32
  }
}

module attributes {stable_mosaic.version = 11 : i64} {
  func.func @fuse_rows_kernel(%arg0: memref<8x64xf32, #tpu.memory_space<vmem>>, %arg1: memref<8x64xf32, #tpu.memory_space<vmem>>, %arg2: memref<1x64xf32, #tpu.memory_space<vmem>>, %arg3: memref<1x64xf32, #tpu.memory_space<vmem>>, %arg4: memref<1x64xf32, #tpu.memory_space<vmem>>, %arg5: memref<1x64xf32, #tpu.memory_space<vmem>>, %arg6: memref<64x64xbf16, #tpu.memory_space<vmem>>, %arg7: memref<64x64xbf16, #tpu.memory_space<vmem>>, %arg8: memref<1x64xf32, #tpu.memory_space<vmem>>, %arg9: memref<64x64xbf16, #tpu.memory_space<vmem>>, %arg10: memref<1x64xf32, #tpu.memory_space<vmem>>, %arg11: memref<1x64xf32, #tpu.memory_space<vmem>>, %arg12: memref<1x64xf32, #tpu.memory_space<vmem>>, %arg13: memref<64x64xbf16, #tpu.memory_space<vmem>>, %arg14: memref<1x64xf32, #tpu.memory_space<vmem>>, %arg15: memref<64x64xbf16, #tpu.memory_space<vmem>>, %arg16: memref<1x64xf32, #tpu.memory_space<vmem>>, %arg17: memref<1x64xf32, #tpu.memory_space<vmem>>, %arg18: memref<1x64xf32, #tpu.memory_space<vmem>>, %arg19: memref<8x64xf32, #tpu.memory_space<vmem>>) attributes {dimension_semantics = [], scalar_prefetch = 0 : i64, scratch_operands = 0 : i64, tpu.core_type = #tpu.core_type<tc>} {
    %c0 = arith.constant 0 : index
    %c0_0 = arith.constant 0 : index
    %0 = vector.load %arg0[%c0, %c0_0] : memref<8x64xf32, #tpu.memory_space<vmem>>, vector<8x64xf32>
    %c0_1 = arith.constant 0 : index
    %c0_2 = arith.constant 0 : index
    %1 = vector.load %arg1[%c0_1, %c0_2] : memref<8x64xf32, #tpu.memory_space<vmem>>, vector<8x64xf32>
    %cst = arith.constant dense<0.000000e+00> : vector<8xf32>
    %2 = vector.multi_reduction <add>, %0, %cst [1] : vector<8x64xf32> to vector<8xf32>
    %3 = vector.shape_cast %2 : vector<8xf32> to vector<8x1xf32>
    %cst_3 = arith.constant 6.400000e+01 : f32
    %4 = vector.broadcast %cst_3 : f32 to vector<8x1xf32>
    %5 = arith.divf %3, %4 : vector<8x1xf32>
    %cst_4 = arith.constant dense<0.000000e+00> : vector<8xf32>
    %6 = vector.multi_reduction <add>, %1, %cst_4 [1] : vector<8x64xf32> to vector<8xf32>
    %7 = vector.shape_cast %6 : vector<8xf32> to vector<8x1xf32>
    %cst_5 = arith.constant 6.400000e+01 : f32
    %8 = vector.broadcast %cst_5 : f32 to vector<8x1xf32>
    %9 = arith.divf %7, %8 : vector<8x1xf32>
    %10 = arith.addf %5, %9 : vector<8x1xf32>
    %cst_6 = arith.constant 5.000000e-01 : f32
    %11 = vector.broadcast %cst_6 : f32 to vector<8x1xf32>
    %12 = arith.mulf %11, %10 : vector<8x1xf32>
    %13 = vector.broadcast %12 : vector<8x1xf32> to vector<8x64xf32>
    %14 = arith.subf %0, %13 : vector<8x64xf32>
    %15 = vector.broadcast %12 : vector<8x1xf32> to vector<8x64xf32>
    %16 = arith.subf %1, %15 : vector<8x64xf32>
    %17 = arith.mulf %14, %14 : vector<8x64xf32>
    %cst_7 = arith.constant dense<0.000000e+00> : vector<8xf32>
    %18 = vector.multi_reduction <add>, %17, %cst_7 [1] : vector<8x64xf32> to vector<8xf32>
    %19 = vector.shape_cast %18 : vector<8xf32> to vector<8x1xf32>
    %cst_8 = arith.constant 6.400000e+01 : f32
    %20 = vector.broadcast %cst_8 : f32 to vector<8x1xf32>
    %21 = arith.divf %19, %20 : vector<8x1xf32>
    %22 = arith.mulf %16, %16 : vector<8x64xf32>
    %cst_9 = arith.constant dense<0.000000e+00> : vector<8xf32>
    %23 = vector.multi_reduction <add>, %22, %cst_9 [1] : vector<8x64xf32> to vector<8xf32>
    %24 = vector.shape_cast %23 : vector<8xf32> to vector<8x1xf32>
    %cst_10 = arith.constant 6.400000e+01 : f32
    %25 = vector.broadcast %cst_10 : f32 to vector<8x1xf32>
    %26 = arith.divf %24, %25 : vector<8x1xf32>
    %27 = arith.addf %21, %26 : vector<8x1xf32>
    %cst_11 = arith.constant 5.000000e-01 : f32
    %28 = vector.broadcast %cst_11 : f32 to vector<8x1xf32>
    %29 = arith.mulf %28, %27 : vector<8x1xf32>
    %cst_12 = arith.constant 9.99999974E-6 : f32
    %30 = vector.broadcast %cst_12 : f32 to vector<8x1xf32>
    %31 = arith.addf %29, %30 : vector<8x1xf32>
    %32 = math.rsqrt %31 : vector<8x1xf32>
    %33 = vector.broadcast %32 : vector<8x1xf32> to vector<8x64xf32>
    %34 = arith.mulf %14, %33 : vector<8x64xf32>
    %c0_13 = arith.constant 0 : index
    %c0_14 = arith.constant 0 : index
    %35 = vector.load %arg2[%c0_13, %c0_14] : memref<1x64xf32, #tpu.memory_space<vmem>>, vector<1x64xf32>
    %36 = vector.broadcast %35 : vector<1x64xf32> to vector<8x64xf32>
    %37 = arith.mulf %34, %36 : vector<8x64xf32>
    %c0_15 = arith.constant 0 : index
    %c0_16 = arith.constant 0 : index
    %38 = vector.load %arg3[%c0_15, %c0_16] : memref<1x64xf32, #tpu.memory_space<vmem>>, vector<1x64xf32>
    %39 = vector.broadcast %38 : vector<1x64xf32> to vector<8x64xf32>
    %40 = arith.addf %37, %39 : vector<8x64xf32>
    %41 = vector.broadcast %32 : vector<8x1xf32> to vector<8x64xf32>
    %42 = arith.mulf %16, %41 : vector<8x64xf32>
    %c0_17 = arith.constant 0 : index
    %c0_18 = arith.constant 0 : index
    %43 = vector.load %arg4[%c0_17, %c0_18] : memref<1x64xf32, #tpu.memory_space<vmem>>, vector<1x64xf32>
    %44 = vector.broadcast %43 : vector<1x64xf32> to vector<8x64xf32>
    %45 = arith.mulf %42, %44 : vector<8x64xf32>
    %c0_19 = arith.constant 0 : index
    %c0_20 = arith.constant 0 : index
    %46 = vector.load %arg5[%c0_19, %c0_20] : memref<1x64xf32, #tpu.memory_space<vmem>>, vector<1x64xf32>
    %47 = vector.broadcast %46 : vector<1x64xf32> to vector<8x64xf32>
    %48 = arith.addf %45, %47 : vector<8x64xf32>
    %c0_21 = arith.constant 0 : index
    %c0_22 = arith.constant 0 : index
    %49 = vector.load %arg6[%c0_21, %c0_22] : memref<64x64xbf16, #tpu.memory_space<vmem>>, vector<64x64xbf16>
    %50 = arith.truncf %40 : vector<8x64xf32> to vector<8x64xbf16>
    %cst_23 = arith.constant dense<0.000000e+00> : vector<8x64xf32>
    %51 = tpu.matmul %50, %49, %cst_23 {dimension_numbers = #tpu.dot_dimension_numbers<[1], [0], [0], [1], [0, 0, 1, 1], [], []>} : vector<8x64xbf16>, vector<64x64xbf16>, vector<8x64xf32> -> vector<8x64xf32>
    %c0_24 = arith.constant 0 : index
    %c0_25 = arith.constant 0 : index
    %52 = vector.load %arg7[%c0_24, %c0_25] : memref<64x64xbf16, #tpu.memory_space<vmem>>, vector<64x64xbf16>
    %53 = arith.truncf %48 : vector<8x64xf32> to vector<8x64xbf16>
    %cst_26 = arith.constant dense<0.000000e+00> : vector<8x64xf32>
    %54 = tpu.matmul %53, %52, %cst_26 {dimension_numbers = #tpu.dot_dimension_numbers<[1], [0], [0], [1], [0, 0, 1, 1], [], []>} : vector<8x64xbf16>, vector<64x64xbf16>, vector<8x64xf32> -> vector<8x64xf32>
    %55 = arith.addf %51, %54 : vector<8x64xf32>
    %c0_27 = arith.constant 0 : index
    %c0_28 = arith.constant 0 : index
    %56 = vector.load %arg8[%c0_27, %c0_28] : memref<1x64xf32, #tpu.memory_space<vmem>>, vector<1x64xf32>
    %57 = vector.broadcast %56 : vector<1x64xf32> to vector<8x64xf32>
    %58 = arith.addf %55, %57 : vector<8x64xf32>
    %cst_29 = arith.constant 5.000000e-01 : f32
    %59 = vector.broadcast %cst_29 : f32 to vector<8x64xf32>
    %60 = arith.mulf %59, %58 : vector<8x64xf32>
    %cst_30 = arith.constant 0.707106769 : f32
    %61 = vector.broadcast %cst_30 : f32 to vector<8x64xf32>
    %62 = arith.mulf %58, %61 : vector<8x64xf32>
    %63 = math.erf %62 : vector<8x64xf32>
    %cst_31 = arith.constant 1.000000e+00 : f32
    %64 = vector.broadcast %cst_31 : f32 to vector<8x64xf32>
    %65 = arith.addf %64, %63 : vector<8x64xf32>
    %66 = arith.mulf %60, %65 : vector<8x64xf32>
    %c0_32 = arith.constant 0 : index
    %c0_33 = arith.constant 0 : index
    %67 = vector.load %arg9[%c0_32, %c0_33] : memref<64x64xbf16, #tpu.memory_space<vmem>>, vector<64x64xbf16>
    %68 = arith.truncf %66 : vector<8x64xf32> to vector<8x64xbf16>
    %cst_34 = arith.constant dense<0.000000e+00> : vector<8x64xf32>
    %69 = tpu.matmul %68, %67, %cst_34 {dimension_numbers = #tpu.dot_dimension_numbers<[1], [0], [0], [1], [0, 0, 1, 1], [], []>} : vector<8x64xbf16>, vector<64x64xbf16>, vector<8x64xf32> -> vector<8x64xf32>
    %c0_35 = arith.constant 0 : index
    %c0_36 = arith.constant 0 : index
    %70 = vector.load %arg10[%c0_35, %c0_36] : memref<1x64xf32, #tpu.memory_space<vmem>>, vector<1x64xf32>
    %71 = vector.broadcast %70 : vector<1x64xf32> to vector<8x64xf32>
    %72 = arith.addf %69, %71 : vector<8x64xf32>
    %73 = arith.addf %72, %0 : vector<8x64xf32>
    %c0_37 = arith.constant 0 : index
    %c0_38 = arith.constant 0 : index
    %74 = vector.load %arg11[%c0_37, %c0_38] : memref<1x64xf32, #tpu.memory_space<vmem>>, vector<1x64xf32>
    %c0_39 = arith.constant 0 : index
    %c0_40 = arith.constant 0 : index
    %75 = vector.load %arg12[%c0_39, %c0_40] : memref<1x64xf32, #tpu.memory_space<vmem>>, vector<1x64xf32>
    %cst_41 = arith.constant dense<0.000000e+00> : vector<8xf32>
    %76 = vector.multi_reduction <add>, %73, %cst_41 [1] : vector<8x64xf32> to vector<8xf32>
    %77 = vector.shape_cast %76 : vector<8xf32> to vector<8x1xf32>
    %cst_42 = arith.constant 6.400000e+01 : f32
    %78 = vector.broadcast %cst_42 : f32 to vector<8x1xf32>
    %79 = arith.divf %77, %78 : vector<8x1xf32>
    %80 = vector.broadcast %79 : vector<8x1xf32> to vector<8x64xf32>
    %81 = arith.subf %73, %80 : vector<8x64xf32>
    %82 = arith.mulf %81, %81 : vector<8x64xf32>
    %cst_43 = arith.constant dense<0.000000e+00> : vector<8xf32>
    %83 = vector.multi_reduction <add>, %82, %cst_43 [1] : vector<8x64xf32> to vector<8xf32>
    %84 = vector.shape_cast %83 : vector<8xf32> to vector<8x1xf32>
    %cst_44 = arith.constant 6.400000e+01 : f32
    %85 = vector.broadcast %cst_44 : f32 to vector<8x1xf32>
    %86 = arith.divf %84, %85 : vector<8x1xf32>
    %cst_45 = arith.constant 9.99999974E-6 : f32
    %87 = vector.broadcast %cst_45 : f32 to vector<8x1xf32>
    %88 = arith.addf %86, %87 : vector<8x1xf32>
    %89 = math.rsqrt %88 : vector<8x1xf32>
    %90 = vector.broadcast %89 : vector<8x1xf32> to vector<8x64xf32>
    %91 = arith.mulf %81, %90 : vector<8x64xf32>
    %92 = vector.broadcast %74 : vector<1x64xf32> to vector<8x64xf32>
    %93 = arith.mulf %91, %92 : vector<8x64xf32>
    %94 = vector.broadcast %75 : vector<1x64xf32> to vector<8x64xf32>
    %95 = arith.addf %93, %94 : vector<8x64xf32>
    %c0_46 = arith.constant 0 : index
    %c0_47 = arith.constant 0 : index
    %96 = vector.load %arg13[%c0_46, %c0_47] : memref<64x64xbf16, #tpu.memory_space<vmem>>, vector<64x64xbf16>
    %97 = arith.truncf %95 : vector<8x64xf32> to vector<8x64xbf16>
    %cst_48 = arith.constant dense<0.000000e+00> : vector<8x64xf32>
    %98 = tpu.matmul %97, %96, %cst_48 {dimension_numbers = #tpu.dot_dimension_numbers<[1], [0], [0], [1], [0, 0, 1, 1], [], []>} : vector<8x64xbf16>, vector<64x64xbf16>, vector<8x64xf32> -> vector<8x64xf32>
    %c0_49 = arith.constant 0 : index
    %c0_50 = arith.constant 0 : index
    %99 = vector.load %arg14[%c0_49, %c0_50] : memref<1x64xf32, #tpu.memory_space<vmem>>, vector<1x64xf32>
    %100 = vector.broadcast %99 : vector<1x64xf32> to vector<8x64xf32>
    %101 = arith.addf %98, %100 : vector<8x64xf32>
    %cst_51 = arith.constant 5.000000e-01 : f32
    %102 = vector.broadcast %cst_51 : f32 to vector<8x64xf32>
    %103 = arith.mulf %102, %101 : vector<8x64xf32>
    %cst_52 = arith.constant 0.707106769 : f32
    %104 = vector.broadcast %cst_52 : f32 to vector<8x64xf32>
    %105 = arith.mulf %101, %104 : vector<8x64xf32>
    %106 = math.erf %105 : vector<8x64xf32>
    %cst_53 = arith.constant 1.000000e+00 : f32
    %107 = vector.broadcast %cst_53 : f32 to vector<8x64xf32>
    %108 = arith.addf %107, %106 : vector<8x64xf32>
    %109 = arith.mulf %103, %108 : vector<8x64xf32>
    %c0_54 = arith.constant 0 : index
    %c0_55 = arith.constant 0 : index
    %110 = vector.load %arg15[%c0_54, %c0_55] : memref<64x64xbf16, #tpu.memory_space<vmem>>, vector<64x64xbf16>
    %111 = arith.truncf %109 : vector<8x64xf32> to vector<8x64xbf16>
    %cst_56 = arith.constant dense<0.000000e+00> : vector<8x64xf32>
    %112 = tpu.matmul %111, %110, %cst_56 {dimension_numbers = #tpu.dot_dimension_numbers<[1], [0], [0], [1], [0, 0, 1, 1], [], []>} : vector<8x64xbf16>, vector<64x64xbf16>, vector<8x64xf32> -> vector<8x64xf32>
    %c0_57 = arith.constant 0 : index
    %c0_58 = arith.constant 0 : index
    %113 = vector.load %arg16[%c0_57, %c0_58] : memref<1x64xf32, #tpu.memory_space<vmem>>, vector<1x64xf32>
    %114 = vector.broadcast %113 : vector<1x64xf32> to vector<8x64xf32>
    %115 = arith.addf %112, %114 : vector<8x64xf32>
    %116 = arith.addf %115, %73 : vector<8x64xf32>
    %c0_59 = arith.constant 0 : index
    %c0_60 = arith.constant 0 : index
    %117 = vector.load %arg17[%c0_59, %c0_60] : memref<1x64xf32, #tpu.memory_space<vmem>>, vector<1x64xf32>
    %c0_61 = arith.constant 0 : index
    %c0_62 = arith.constant 0 : index
    %118 = vector.load %arg18[%c0_61, %c0_62] : memref<1x64xf32, #tpu.memory_space<vmem>>, vector<1x64xf32>
    %cst_63 = arith.constant dense<0.000000e+00> : vector<8xf32>
    %119 = vector.multi_reduction <add>, %116, %cst_63 [1] : vector<8x64xf32> to vector<8xf32>
    %120 = vector.shape_cast %119 : vector<8xf32> to vector<8x1xf32>
    %cst_64 = arith.constant 6.400000e+01 : f32
    %121 = vector.broadcast %cst_64 : f32 to vector<8x1xf32>
    %122 = arith.divf %120, %121 : vector<8x1xf32>
    %123 = vector.broadcast %122 : vector<8x1xf32> to vector<8x64xf32>
    %124 = arith.subf %116, %123 : vector<8x64xf32>
    %125 = arith.mulf %124, %124 : vector<8x64xf32>
    %cst_65 = arith.constant dense<0.000000e+00> : vector<8xf32>
    %126 = vector.multi_reduction <add>, %125, %cst_65 [1] : vector<8x64xf32> to vector<8xf32>
    %127 = vector.shape_cast %126 : vector<8xf32> to vector<8x1xf32>
    %cst_66 = arith.constant 6.400000e+01 : f32
    %128 = vector.broadcast %cst_66 : f32 to vector<8x1xf32>
    %129 = arith.divf %127, %128 : vector<8x1xf32>
    %cst_67 = arith.constant 9.99999974E-6 : f32
    %130 = vector.broadcast %cst_67 : f32 to vector<8x1xf32>
    %131 = arith.addf %129, %130 : vector<8x1xf32>
    %132 = math.rsqrt %131 : vector<8x1xf32>
    %133 = vector.broadcast %132 : vector<8x1xf32> to vector<8x64xf32>
    %134 = arith.mulf %124, %133 : vector<8x64xf32>
    %135 = vector.broadcast %117 : vector<1x64xf32> to vector<8x64xf32>
    %136 = arith.mulf %134, %135 : vector<8x64xf32>
    %137 = vector.broadcast %118 : vector<1x64xf32> to vector<8x64xf32>
    %138 = arith.addf %136, %137 : vector<8x64xf32>
    %c0_68 = arith.constant 0 : index
    %c0_69 = arith.constant 0 : index
    %139 = vector.load %arg19[%c0_68, %c0_69] : memref<8x64xf32, #tpu.memory_space<vmem>>, vector<8x64xf32>
    tpu.vector_store %arg19[%c0_68, %c0_69], %138 {strides = array<i32>} : memref<8x64xf32, #tpu.memory_space<vmem>>, vector<8x64xf32>,
    return
  }
}

</mosaic_0001>

<llo_original>
// kernel: _forward_impl.3
$region0: #{_forward_impl.3}
  #allocation0 [shape = 'u32[]', space=smem, size = 0x4, offset = 0x4, fixed_abs, tag = 'smem constant byte address 0x4 - core index']
  #allocation1 [shape = 'u32[72,128]{1,0:T(1,128)}', space=vmem, size = 0x9000, scoped, tag = 'internal scratch']
  %s0 = inlined_call_operand.vmem [shape: s32[32,1], index: 0, kind: input, shape index: {}]
  %s1 = inlined_call_operand.vmem [shape: f32[32,64], index: 1, kind: input, shape index: {}]
  %s2 = inlined_call_operand.vmem [shape: f32[8,64], index: 2, kind: input, shape index: {}]
  %s3 = inlined_call_operand.hbm [shape: f32[32,64], index: 3, kind: output, shape index: {}]
  %s4 = sld [smem:[#allocation0]]
  $region45: #{_forward_impl.3} parent=0
    _
  %s6 = ssub.s32 1, %s4
  %s7 = scalar_select 0, %s6, %s4
  $region1: #{_forward_impl.3} parent=0
    #allocation2 [shape = 'u8[16384]{0}', space=vmem, size = 0x4000, scoped, tag = 'output window, operand 0']
    #allocation3 [shape = 's32[2]{0}', space=sflag, size = 0x8, scoped, tag = 'scoped memory for _forward_impl.3']
    %8 = vsyncpa [#allocation3], 0
    %s9 = scalar_lea.sflag [#allocation3], 1
    %10 = vsyncpa %s9, 0
    loop: start=0, step=1, limit=4
    $region2: #{_forward_impl.3} parent=1 // loop_pre_header
      _
    $region3: #{_forward_impl.3} parent=1 // loop_header
      %s12 = sphi 0, %s16
      %p13 = scmp.ge.s32.totalorder %s12, 4
      %s22 = sphi 0, %s24
      %s25 = sphi 0, %s22
      %s26 = sphi 0, %s25
      %s42 = sphi 0, %s26
      %s48 = sphi 0, %s50
      %s51 = sphi 0, %s48
      %s52 = sphi 0, %s51
      %s68 = sphi 0, %s52
      %s72 = sphi 0, %s72
      %s74 = sphi 0, %s72
      %s75 = sphi 0, %s74
      %s89 = sphi 0, %s75
      %s95 = sphi 0, %s97
      %s98 = sphi 0, %s95
      %s99 = sphi 0, %s98
      %s115 = sphi 0, %s99
    $region4: #{_forward_impl.3} parent=1 // loop_header_branch
      %15 = sbr.rel (%p13) target = $region8
    $region5: #{_forward_impl.3} parent=1 // loop_body
      %s17 = ssub.s32 %s12, 1
      %s18 = ssub.s32 %s12, 2
      %s19 = sadd.s32 %s12, 1
      %s20 = ssub.s32 %s12, %s19
      %p21 = scmp.eq.s32.totalorder %s20, 0
      %s23 = sadd.s32 %s22, 1
      %s24 = scalar_select %p21, %s22, %s23
      %p27 = pneg %p21
      %p28 = scmp.eq.s32.totalorder %s12, 1
      %p29 = por %p27, %p28
      %p30 = scmp.ne.s32.totalorder %s22, %s25
      %p31 = scmp.eq.s32.totalorder %s12, 0
      %p32 = por %p30, %p31
      %p33 = scmp.ne.s32.totalorder %s22, %s25
      %p34 = scmp.eq.s32.totalorder %s17, 1
      %p35 = por %p33, %p34
      %p36 = scmp.ne.s32.totalorder %s25, %s26
      %p37 = scmp.eq.s32.totalorder %s17, 0
      %p38 = por %p36, %p37
      %p39 = scmp.ne.s32.totalorder %s25, %s26
      %p40 = scmp.eq.s32.totalorder %s18, 1
      %p41 = por %p39, %p40
      %p43 = scmp.ne.s32.totalorder %s26, %s42
      %p44 = scmp.eq.s32.totalorder %s18, 0
      %p45 = por %p43, %p44
      %s46 = ssub.s32 %s12, %s19
      %p47 = scmp.eq.s32.totalorder %s46, 0
      %s49 = sadd.s32 %s48, 1
      %s50 = scalar_select %p47, %s48, %s49
      %p53 = pneg %p47
      %p54 = scmp.eq.s32.totalorder %s12, 1
      %p55 = por %p53, %p54
      %p56 = scmp.ne.s32.totalorder %s48, %s51
      %p57 = scmp.eq.s32.totalorder %s12, 0
      %p58 = por %p56, %p57
      %p59 = scmp.ne.s32.totalorder %s48, %s51
      %p60 = scmp.eq.s32.totalorder %s17, 1
      %p61 = por %p59, %p60
      %p62 = scmp.ne.s32.totalorder %s51, %s52
      %p63 = scmp.eq.s32.totalorder %s17, 0
      %p64 = por %p62, %p63
      %p65 = scmp.ne.s32.totalorder %s51, %s52
      %p66 = scmp.eq.s32.totalorder %s18, 1
      %p67 = por %p65, %p66
      %p69 = scmp.ne.s32.totalorder %s52, %s68
      %p70 = scmp.eq.s32.totalorder %s18, 0
      %p71 = por %p69, %p70
      %s73 = sadd.s32 %s72, 1
      %p76 = scmp.eq.s32.totalorder %s12, 1
      %p77 = scmp.ne.s32.totalorder %s72, %s74
      %p78 = scmp.eq.s32.totalorder %s12, 0
      %p79 = por %p77, %p78
      %p80 = scmp.ne.s32.totalorder %s72, %s74
      %p81 = scmp.eq.s32.totalorder %s17, 1
      %p82 = por %p80, %p81
      %p83 = scmp.ne.s32.totalorder %s74, %s75
      %p84 = scmp.eq.s32.totalorder %s17, 0
      %p85 = por %p83, %p84
      %p86 = scmp.ne.s32.totalorder %s74, %s75
      %p87 = scmp.eq.s32.totalorder %s18, 1
      %p88 = por %p86, %p87
      %p90 = scmp.ne.s32.totalorder %s75, %s89
      %p91 = scmp.eq.s32.totalorder %s18, 0
      %p92 = por %p90, %p91
      %s93 = ssub.s32 %s12, %s19
      %p94 = scmp.eq.s32.totalorder %s93, 0
      %s96 = sadd.s32 %s95, 1
      %s97 = scalar_select %p94, %s95, %s96
      %p100 = pneg %p94
      %p101 = scmp.eq.s32.totalorder %s12, 1
      %p102 = por %p100, %p101
      %p103 = scmp.ne.s32.totalorder %s95, %s98
      %p104 = scmp.eq.s32.totalorder %s12, 0
      %p105 = por %p103, %p104
      %p106 = scmp.ne.s32.totalorder %s95, %s98
      %p107 = scmp.eq.s32.totalorder %s17, 1
      %p108 = por %p106, %p107
      %p109 = scmp.ne.s32.totalorder %s98, %s99
      %p110 = scmp.eq.s32.totalorder %s17, 0
      %p111 = por %p109, %p110
      %p112 = scmp.ne.s32.totalorder %s98, %s99
      %p113 = scmp.eq.s32.totalorder %s18, 1
      %p114 = por %p112, %p113
      %p116 = scmp.ne.s32.totalorder %s99, %s115
      %p117 = scmp.eq.s32.totalorder %s18, 0
      %p118 = por %p116, %p117
      %p119 = scmp.le.s32.totalorder 1, %s12
      %p120 = scmp.lt.s32.totalorder %s12, 3
      %p121 = pnand %p119, %p120
      %p122 = pneg %p121
      // Predicated region
      $region9: #{_forward_impl.3} parent=5 // pred_check
        _
      $region10: #{_forward_impl.3} parent=5 // pred_check_branch
        %124 = sbr.rel (%p121) target = $region12
      $region11: #{_forward_impl.3} parent=5 // pred_region
        %s125 = ssub.s32 %s12, 1
        // Predicated region
        $region13: #{_forward_impl.3} parent=11 // pred_check
          %p126 = pneg %p85
        $region14: #{_forward_impl.3} parent=11 // pred_check_branch
          %128 = sbr.rel (%p126) target = $region16
        $region15: #{_forward_impl.3} parent=11 // pred_region
          _
        $region16: #{_forward_impl.3} parent=11 // pred_fallthru
          _
      $region12: #{_forward_impl.3} parent=5 // pred_fallthru
        _
      %p129 = scmp.lt.s32.totalorder %s12, 2
      // Predicated region
      $region17: #{_forward_impl.3} parent=5 // pred_check
        %p130 = pneg %p129
      $region18: #{_forward_impl.3} parent=5 // pred_check_branch
        %132 = sbr.rel (%p130) target = $region20
      $region19: #{_forward_impl.3} parent=5 // pred_region
        // Predicated region
        $region21: #{_forward_impl.3} parent=19 // pred_check
          %p133 = pneg %p32
        $region22: #{_forward_impl.3} parent=19 // pred_check_branch
          %135 = sbr.rel (%p133) target = $region24
        $region23: #{_forward_impl.3} parent=19 // pred_region
          %s136 = smul.u32 2, %s12
          %p137 = scmp.lt.s32.totalorder %s136, 3
          %s138 = scalar_select %p137, %s136, 3
          %s139 = smul.addr %s138, 8
          %s140 = scalar_lea.vmem %s0, %s139
          %s141 = smul.u32 2, %s12
        $region24: #{_forward_impl.3} parent=19 // pred_fallthru
          _
        // Predicated region
        $region25: #{_forward_impl.3} parent=19 // pred_check
          %p142 = pneg %p58
        $region26: #{_forward_impl.3} parent=19 // pred_check_branch
          %144 = sbr.rel (%p142) target = $region28
        $region27: #{_forward_impl.3} parent=19 // pred_region
          %s145 = smul.u32 2, %s12
          %p146 = scmp.lt.s32.totalorder %s145, 3
          %s147 = scalar_select %p146, %s145, 3
          %s148 = smul.addr %s147, 8
          %s149 = scalar_lea.vmem %s1, %s148
          %s150 = smul.u32 2, %s12
        $region28: #{_forward_impl.3} parent=19 // pred_fallthru
          _
      $region20: #{_forward_impl.3} parent=5 // pred_fallthru
        _
      %p151 = scmp.le.s32.totalorder 1, %s12
      %p152 = scmp.lt.s32.totalorder %s12, 3
      %p153 = pnand %p151, %p152
      %p154 = pneg %p153
      // Predicated region
      $region29: #{_forward_impl.3} parent=5 // pred_check
        _
      $region30: #{_forward_impl.3} parent=5 // pred_check_branch
        %156 = sbr.rel (%p153) target = $region32
      $region31: #{_forward_impl.3} parent=5 // pred_region
        %s157 = ssub.s32 %s12, 1
        %s158 = smul.u32 2, %s17
        %p159 = scmp.lt.s32.totalorder %s158, 3
        %s160 = scalar_select %p159, %s158, 3
        %s161 = smul.addr %s160, 8
        %s162 = scalar_lea.vmem %s0, %s161
        %p163 = pneg %p38
        %p164 = pneg %p35
        %s165 = smul.u32 2, %s17
        %p166 = scmp.lt.s32.totalorder %s165, 3
        %s167 = scalar_select %p166, %s165, 3
        %s168 = smul.addr %s167, 8
        %s169 = scalar_lea.vmem %s1, %s168
        %p170 = pneg %p64
        %p171 = pneg %p61
        %p172 = pneg %p85
        %p173 = pneg %p82
        %p174 = pneg %p111
        %p175 = pneg %p108
        %s176 = sand.u32 %s98, 1
        %s177 = scalar_lea.sflag [#allocation3], %s176
        %s178 = sand.u32 %s98, 1
        %s179 = smul.addr %s178, 16
        %s180 = scalar_lea.vmem [#allocation2], %s179
        %s181 = smul.u32 2, %s17
        %p182 = scmp.lt.s32.totalorder %s181, 3
        %s183 = scalar_select %p182, %s181, 3
        %s184 = smul.addr %s183, 8
        %s185 = scalar_lea.vmem %s0, %s184
        %s186 = smul.u32 2, %s17
        %s187 = smul.u32 2, %s17
        %p188 = scmp.lt.s32.totalorder %s187, 3
        %s189 = scalar_select %p188, %s187, 3
        %s190 = smul.addr %s189, 8
        %s191 = scalar_lea.vmem %s1, %s190
        %s192 = smul.u32 2, %s17
        %s193 = smul.u32 2, %s17
        %v194 = vld [vmem:[%s185] sm:$0xff]
        %v195 = vld [vmem:[%s185 + $0x8] sm:$0xff]
        %v196 = vld [vmem:[%s191] sm:$0xff]
        %v197 = vld [vmem:[%s191 + $0x8] sm:$0xff]
        %v198 = vlaneseq
        %v199 = vand.u32 %v198, 127
        %200 = vset.pattern.permute.xlu0 0
        %201 = vperm.xlu0 %200, %v194
        %v202 = vpop.permute.xlu0 %201
        %203 = vset.pattern.permute.xlu0 0
        %204 = vperm.xlu0 %203, %v195
        %v205 = vpop.permute.xlu0 %204
        %vm206 = vcmp.eq.s32.totalorder %v202, %v199
        %vm207 = vcmp.eq.s32.totalorder %v205, %v199
        %v208 = vsel %vm206, 1, 0
        %v209 = vsel %vm207, 1, 0
        %v210 = vcvt.s32.f32 %v208
        %v211 = vcvt.s32.f32 %v209
        %v212 = vld [vmem:[%s2] sm:$0xff]
        %vm213 = vcmask 64512
        %v215 = vsel %vm213, %v210, 0
        %v218 = vsel %vm213, %v211, 0
        %220 = vmatpush.msra.mxu0 0.0
        %221 = vmatpush.msra.mxu0 0.0
        %222 = vmatpush.msra.mxu0 0.0
        %223 = vmatpush.msra.mxu0 0.0
        %224 = vmatpush.msra.mxu0 0.0
        %225 = vmatpush.msra.mxu0 0.0
        %226 = vmatpush.msra.mxu0 0.0
        %227 = vmatpush.msra.mxu0 0.0
        %228 = vmatpush.msra.mxu0 0.0
        %229 = vmatpush.msra.mxu0 0.0
        %230 = vmatpush.msra.mxu0 0.0
        %231 = vmatpush.msra.mxu0 0.0
        %232 = vmatpush.msra.mxu0 0.0
        %233 = vmatpush.msra.mxu0 0.0
        %234 = vmatpush.msra.mxu0 0.0
        %235 = vmatpush.msra.mxu0 %v212
        %236 = vmatmul.f32.gmra.mxu0 %v215
        %v237 = vpop.f32.mrf.mxu0
        %v238 = vadd.f32 0.0, %v237
        %239 = vmatmul.f32.gmra.mxu0 %v218
        %v240 = vpop.f32.mrf.mxu0
        %v241 = vadd.f32 0.0, %v240
        %242 = vdwg.mxu0
        %vm243 = vcmp.ge.s32.totalorder %v194, 0
        %vm244 = vcmp.ge.s32.totalorder %v195, 0
        %v245 = vsel %vm243, 1, 0
        %v246 = vsel %vm244, 1, 0
        %247 = vset.pattern.permute.xlu0 0
        %248 = vperm.xlu0 %247, %v245
        %v249 = vpop.permute.xlu0 %248
        %250 = vset.pattern.permute.xlu0 0
        %251 = vperm.xlu0 %250, %v246
        %v252 = vpop.permute.xlu0 %251
        %vm253 = vcmp.eq.s32.totalorder %v249, 1
        %vm254 = vcmp.eq.s32.totalorder %v252, 1
        %v255 = vsel %vm253, %v238, %v196
        %v256 = vsel %vm254, %v241, %v197
        %vm257 = vcmask 523264
        %258 = vst.msk [vmem:[%s180] sm:$0xff] %vm257, %v255
        %259 = vst.msk [vmem:[%s180 + $0x8] sm:$0xff] %vm257, %v256
        %s260 = sand.u32 %s98, 1
        %s261 = scalar_lea.sflag [#allocation3], %s260
        %s262 = sand.u32 %s98, 1
        %s263 = smul.addr %s262, 16
        %s264 = scalar_lea.vmem [#allocation2], %s263
        // Predicated region
        $region33: #{_forward_impl.3} parent=31 // pred_check
          %p265 = pneg %p108
        $region34: #{_forward_impl.3} parent=31 // pred_check_branch
          %267 = sbr.rel (%p265) target = $region36
        $region35: #{_forward_impl.3} parent=31 // pred_region
          %s268 = smul.u32 2, %s17
          %270 = vsyncadd %s261, 0
          %s271 = smul.addr %s268, 8
          %s272 = scalar_lea.hbm %s3, %s271
          %s273 = sshll.u32 %s264, 4
          %s274 = int_to_ptr.vmem [resolvable:$true] %s273
          %s275 = sshll.u32 %s272, 4
          %s276 = int_to_ptr.hbm [resolvable:$true] %s275
          %281 = dma.vmem_to_hbm [thread:$0]  %s274, 256, %s276, %s261, 128, 128, 8
        $region36: #{_forward_impl.3} parent=31 // pred_fallthru
          _
      $region32: #{_forward_impl.3} parent=5 // pred_fallthru
        _
      %p282 = scmp.le.s32.totalorder 2, %s12
      // Predicated region
      $region37: #{_forward_impl.3} parent=5 // pred_check
        %p283 = pneg %p282
      $region38: #{_forward_impl.3} parent=5 // pred_check_branch
        %285 = sbr.rel (%p283) target = $region40
      $region39: #{_forward_impl.3} parent=5 // pred_region
        %s286 = ssub.s32 %s12, 2
        // Predicated region
        $region41: #{_forward_impl.3} parent=39 // pred_check
          %p287 = pneg %p114
        $region42: #{_forward_impl.3} parent=39 // pred_check_branch
          %289 = sbr.rel (%p287) target = $region44
        $region43: #{_forward_impl.3} parent=39 // pred_region
          %s290 = sand.u32 %s99, 1
          %s291 = scalar_lea.sflag [#allocation3], %s290
          %s292 = sand.u32 %s99, 1
          %s293 = smul.addr %s292, 16
          %s294 = scalar_lea.vmem [#allocation2], %s293
          %296 = dma.done %s291, 256
        $region44: #{_forward_impl.3} parent=39 // pred_fallthru
          _
      $region40: #{_forward_impl.3} parent=5 // pred_fallthru
        _
    $region6: #{_forward_impl.3} parent=1 // loop_footer
      %s16 = sadd.s32 1, %s12
    $region7: #{_forward_impl.3} parent=1 // loop_footer_branch
      %11 = sbr.rel target = $region3
    $region8: #{_forward_impl.3} parent=1 // loop_exit
      _
    %297 = vsyncpa [#allocation3], 1
    %s298 = scalar_lea.sflag [#allocation3], 1
    %299 = vsyncpa %s298, 1

// kernel: _forward_impl.2
$region0: #{_forward_impl.2}
  #allocation0 [shape = 'u32[]', space=smem, size = 0x4, offset = 0x4, fixed_abs, tag = 'smem constant byte address 0x4 - core index']
  #allocation1 [shape = 'u32[72,128]{1,0:T(1,128)}', space=vmem, size = 0x9000, scoped, tag = 'internal scratch']
  %s0 = inlined_call_operand.vmem [shape: f32[8,64], index: 0, kind: input, shape index: {}]
  %s1 = inlined_call_operand.vmem [shape: f32[8,64], index: 1, kind: input, shape index: {}]
  %s2 = inlined_call_operand.vmem [shape: f32[1,64], index: 2, kind: input, shape index: {}]
  %s3 = inlined_call_operand.vmem [shape: f32[1,64], index: 3, kind: input, shape index: {}]
  %s4 = inlined_call_operand.vmem [shape: f32[1,64], index: 4, kind: input, shape index: {}]
  %s5 = inlined_call_operand.vmem [shape: f32[1,64], index: 5, kind: input, shape index: {}]
  %s6 = inlined_call_operand.vmem [shape: bf16[64,64], index: 6, kind: input, shape index: {}]
  %s7 = inlined_call_operand.vmem [shape: bf16[64,64], index: 7, kind: input, shape index: {}]
  %s8 = inlined_call_operand.vmem [shape: f32[1,64], index: 8, kind: input, shape index: {}]
  %s9 = inlined_call_operand.vmem [shape: bf16[64,64], index: 9, kind: input, shape index: {}]
  %s10 = inlined_call_operand.vmem [shape: f32[1,64], index: 10, kind: input, shape index: {}]
  %s11 = inlined_call_operand.vmem [shape: f32[1,64], index: 11, kind: input, shape index: {}]
  %s12 = inlined_call_operand.vmem [shape: f32[1,64], index: 12, kind: input, shape index: {}]
  %s13 = inlined_call_operand.vmem [shape: bf16[64,64], index: 13, kind: input, shape index: {}]
  %s14 = inlined_call_operand.vmem [shape: f32[1,64], index: 14, kind: input, shape index: {}]
  %s15 = inlined_call_operand.vmem [shape: bf16[64,64], index: 15, kind: input, shape index: {}]
  %s16 = inlined_call_operand.vmem [shape: f32[1,64], index: 16, kind: input, shape index: {}]
  %s17 = inlined_call_operand.vmem [shape: f32[1,64], index: 17, kind: input, shape index: {}]
  %s18 = inlined_call_operand.vmem [shape: f32[1,64], index: 18, kind: input, shape index: {}]
  %s19 = inlined_call_operand.vmem [shape: f32[8,64], index: 19, kind: output, shape index: {}]
  %s20 = sld [smem:[#allocation0]]
  $region86: #{_forward_impl.2} parent=0
    _
  %s22 = ssub.s32 1, %s20
  %s23 = scalar_select 0, %s22, %s20
  // Predicated region
  $region2: #{_forward_impl.2} parent=0 // pred_check
    _
  $region3: #{_forward_impl.2} parent=0 // pred_check_branch
    %25 = sbr.rel (0) target = $region5
  $region4: #{_forward_impl.2} parent=0 // pred_region
    _
  $region5: #{_forward_impl.2} parent=0 // pred_fallthru
    _
  // Predicated region
  $region6: #{_forward_impl.2} parent=0 // pred_check
    _
  $region7: #{_forward_impl.2} parent=0 // pred_check_branch
    %27 = sbr.rel (0) target = $region9
  $region8: #{_forward_impl.2} parent=0 // pred_region
    _
  $region9: #{_forward_impl.2} parent=0 // pred_fallthru
    _
  // Predicated region
  $region10: #{_forward_impl.2} parent=0 // pred_check
    _
  $region11: #{_forward_impl.2} parent=0 // pred_check_branch
    %29 = sbr.rel (0) target = $region13
  $region12: #{_forward_impl.2} parent=0 // pred_region
    _
  $region13: #{_forward_impl.2} parent=0 // pred_fallthru
    _
  // Predicated region
  $region14: #{_forward_impl.2} parent=0 // pred_check
    _
  $region15: #{_forward_impl.2} parent=0 // pred_check_branch
    %31 = sbr.rel (0) target = $region17
  $region16: #{_forward_impl.2} parent=0 // pred_region
    _
  $region17: #{_forward_impl.2} parent=0 // pred_fallthru
    _
  // Predicated region
  $region18: #{_forward_impl.2} parent=0 // pred_check
    _
  $region19: #{_forward_impl.2} parent=0 // pred_check_branch
    %33 = sbr.rel (0) target = $region21
  $region20: #{_forward_impl.2} parent=0 // pred_region
    _
  $region21: #{_forward_impl.2} parent=0 // pred_fallthru
    _
  // Predicated region
  $region22: #{_forward_impl.2} parent=0 // pred_check
    _
  $region23: #{_forward_impl.2} parent=0 // pred_check_branch
    %35 = sbr.rel (0) target = $region25
  $region24: #{_forward_impl.2} parent=0 // pred_region
    _
  $region25: #{_forward_impl.2} parent=0 // pred_fallthru
    _
  // Predicated region
  $region26: #{_forward_impl.2} parent=0 // pred_check
    _
  $region27: #{_forward_impl.2} parent=0 // pred_check_branch
    %37 = sbr.rel (0) target = $region29
  $region28: #{_forward_impl.2} parent=0 // pred_region
    _
  $region29: #{_forward_impl.2} parent=0 // pred_fallthru
    _
  // Predicated region
  $region30: #{_forward_impl.2} parent=0 // pred_check
    _
  $region31: #{_forward_impl.2} parent=0 // pred_check_branch
    %39 = sbr.rel (0) target = $region33
  $region32: #{_forward_impl.2} parent=0 // pred_region
    _
  $region33: #{_forward_impl.2} parent=0 // pred_fallthru
    _
  // Predicated region
  $region34: #{_forward_impl.2} parent=0 // pred_check
    _
  $region35: #{_forward_impl.2} parent=0 // pred_check_branch
    %41 = sbr.rel (0) target = $region37
  $region36: #{_forward_impl.2} parent=0 // pred_region
    _
  $region37: #{_forward_impl.2} parent=0 // pred_fallthru
    _
  // Predicated region
  $region38: #{_forward_impl.2} parent=0 // pred_check
    _
  $region39: #{_forward_impl.2} parent=0 // pred_check_branch
    %43 = sbr.rel (0) target = $region41
  $region40: #{_forward_impl.2} parent=0 // pred_region
    _
  $region41: #{_forward_impl.2} parent=0 // pred_fallthru
    _
  // Predicated region
  $region42: #{_forward_impl.2} parent=0 // pred_check
    _
  $region43: #{_forward_impl.2} parent=0 // pred_check_branch
    %45 = sbr.rel (0) target = $region45
  $region44: #{_forward_impl.2} parent=0 // pred_region
    _
  $region45: #{_forward_impl.2} parent=0 // pred_fallthru
    _
  // Predicated region
  $region46: #{_forward_impl.2} parent=0 // pred_check
    _
  $region47: #{_forward_impl.2} parent=0 // pred_check_branch
    %47 = sbr.rel (0) target = $region49
  $region48: #{_forward_impl.2} parent=0 // pred_region
    _
  $region49: #{_forward_impl.2} parent=0 // pred_fallthru
    _
  // Predicated region
  $region50: #{_forward_impl.2} parent=0 // pred_check
    _
  $region51: #{_forward_impl.2} parent=0 // pred_check_branch
    %49 = sbr.rel (0) target = $region53
  $region52: #{_forward_impl.2} parent=0 // pred_region
    _
  $region53: #{_forward_impl.2} parent=0 // pred_fallthru
    _
  // Predicated region
  $region54: #{_forward_impl.2} parent=0 // pred_check
    _
  $region55: #{_forward_impl.2} parent=0 // pred_check_branch
    %51 = sbr.rel (0) target = $region57
  $region56: #{_forward_impl.2} parent=0 // pred_region
    _
  $region57: #{_forward_impl.2} parent=0 // pred_fallthru
    _
  // Predicated region
  $region58: #{_forward_impl.2} parent=0 // pred_check
    _
  $region59: #{_forward_impl.2} parent=0 // pred_check_branch
    %53 = sbr.rel (0) target = $region61
  $region60: #{_forward_impl.2} parent=0 // pred_region
    _
  $region61: #{_forward_impl.2} parent=0 // pred_fallthru
    _
  // Predicated region
  $region62: #{_forward_impl.2} parent=0 // pred_check
    _
  $region63: #{_forward_impl.2} parent=0 // pred_check_branch
    %55 = sbr.rel (0) target = $region65
  $region64: #{_forward_impl.2} parent=0 // pred_region
    _
  $region65: #{_forward_impl.2} parent=0 // pred_fallthru
    _
  // Predicated region
  $region66: #{_forward_impl.2} parent=0 // pred_check
    _
  $region67: #{_forward_impl.2} parent=0 // pred_check_branch
    %57 = sbr.rel (0) target = $region69
  $region68: #{_forward_impl.2} parent=0 // pred_region
    _
  $region69: #{_forward_impl.2} parent=0 // pred_fallthru
    _
  // Predicated region
  $region70: #{_forward_impl.2} parent=0 // pred_check
    _
  $region71: #{_forward_impl.2} parent=0 // pred_check_branch
    %59 = sbr.rel (0) target = $region73
  $region72: #{_forward_impl.2} parent=0 // pred_region
    _
  $region73: #{_forward_impl.2} parent=0 // pred_fallthru
    _
  // Predicated region
  $region74: #{_forward_impl.2} parent=0 // pred_check
    _
  $region75: #{_forward_impl.2} parent=0 // pred_check_branch
    %61 = sbr.rel (0) target = $region77
  $region76: #{_forward_impl.2} parent=0 // pred_region
    _
  $region77: #{_forward_impl.2} parent=0 // pred_fallthru
    _
  %v63 = vld [vmem:[%s0] sm:$0xff]
  %v64 = vld [vmem:[%s1] sm:$0xff]
  %vm65 = vcmask 523264
  %v66 = vsel %vm65, %v63, 0.0
  %67 = vadd.xlane.f32.xlu0 %v66
  %v68 = vpop.xlane.xlu0 %67
  %v69 = vrcp.pop 64.0
  %v70 = vmul.f32 64.0, %v69
  %v71 = vsub.f32 1.0, %v70
  %v72 = vmul.f32 %v69, %v71
  %v73 = vadd.f32 %v69, %v72
  %vm74 = vweird.f32 %v69
  %v75 = vsel %vm74, %v69, %v73
  %v76 = vmul.f32 %v68, %v75
  %v77 = vsel %vm65, %v64, 0.0
  %78 = vadd.xlane.f32.xlu0 %v77
  %v79 = vpop.xlane.xlu0 %78
  %v80 = vmul.f32 %v79, %v75
  %v81 = vadd.f32 %v76, %v80
  %v82 = vmul.f32 %v81, 0.5
  %v83 = vsub.f32 %v63, %v82
  %v84 = vsub.f32 %v64, %v82
  %v85 = vmul.f32 %v83, %v83
  %v86 = vsel %vm65, %v85, 0.0
  %87 = vadd.xlane.f32.xlu0 %v86
  %v88 = vpop.xlane.xlu0 %87
  %v89 = vmul.f32 %v88, %v75
  %v90 = vmul.f32 %v84, %v84
  %v91 = vsel %vm65, %v90, 0.0
  %92 = vadd.xlane.f32.xlu0 %v91
  %v93 = vpop.xlane.xlu0 %92
  %v94 = vmul.f32 %v93, %v75
  %v95 = vadd.f32 %v89, %v94
  %v96 = vmul.f32 %v95, 0.5
  %v97 = vadd.f32 %v96, 1e-05
  %v98 = vrsqrt.pop %v97
  %v99 = vmul.f32 %v98, %v97
  %v100 = vmul.f32 %v99, %v98
  %v101 = vmul.f32 0.5, %v100
  %v102 = vsub.f32 1.5, %v101
  %v103 = vmul.f32 %v98, %v102
  %vm104 = vweird.f32 %v97
  %vm105 = vweird.f32 %v98
  %vm106 = vmor %vm104, %vm105
  %v107 = vsel %vm106, %v98, %v103
  %v108 = vmul.f32 %v83, %v107
  %v109 = vld [vmem:[%s2] sm:$0x1]
  %v111 = vperm.slane %v109, 0
  %v113 = vmul.f32 %v108, %v111
  %v114 = vld [vmem:[%s3] sm:$0x1]
  %v116 = vperm.slane %v114, 0
  %v118 = vadd.f32 %v113, %v116
  %v119 = vmul.f32 %v84, %v107
  %v120 = vld [vmem:[%s4] sm:$0x1]
  %v122 = vperm.slane %v120, 0
  %v124 = vmul.f32 %v119, %v122
  %v125 = vld [vmem:[%s5] sm:$0x1]
  %v127 = vperm.slane %v125, 0
  %v129 = vadd.f32 %v124, %v127
  %v130 = vld [vmem:[%s6] sm:$0xf]
  %v131 = vld [vmem:[%s6 + $0x4] sm:$0xf]
  %v132 = vld [vmem:[%s6 + $0x8] sm:$0xf]
  %v133 = vld [vmem:[%s6 + $0xc] sm:$0xf]
  %v134 = vld [vmem:[%s6 + $0x10] sm:$0xf]
  %v135 = vld [vmem:[%s6 + $0x14] sm:$0xf]
  %v136 = vld [vmem:[%s6 + $0x18] sm:$0xf]
  %v137 = vld [vmem:[%s6 + $0x1c] sm:$0xf]
  %v138 = vpack.c.bf16 %v118, %v118
  %v139 = vld [vmem:[%s7] sm:$0xf]
  %v140 = vld [vmem:[%s7 + $0x4] sm:$0xf]
  %v141 = vld [vmem:[%s7 + $0x8] sm:$0xf]
  %v142 = vld [vmem:[%s7 + $0xc] sm:$0xf]
  %v143 = vld [vmem:[%s7 + $0x10] sm:$0xf]
  %v144 = vld [vmem:[%s7 + $0x14] sm:$0xf]
  %v145 = vld [vmem:[%s7 + $0x18] sm:$0xf]
  %v146 = vld [vmem:[%s7 + $0x1c] sm:$0xf]
  %v147 = vpack.c.bf16 %v129, %v129
  %v156 = vunpack.c.l.b16 %v139
  %v157 = vunpack.c.l.b16 %v140
  %v158 = vunpack.c.l.b16 %v141
  %v159 = vunpack.c.l.b16 %v142
  %v160 = vunpack.c.l.b16 %v143
  %v161 = vunpack.c.l.b16 %v144
  %v162 = vunpack.c.l.b16 %v145
  %v163 = vunpack.c.l.b16 %v146
  %v164 = vpack.c.b16 %v157, %v156
  %v165 = vpack.c.b16 %v159, %v158
  %v166 = vpack.c.b16 %v161, %v160
  %v167 = vpack.c.b16 %v163, %v162
  %v173 = vsel %vm65, %v147, 0
  %175 = vmatpush.bf16.msra.mxu0 0
  %176 = vmatpush.bf16.msra.mxu0 0
  %177 = vmatpush.bf16.msra.mxu0 0
  %178 = vmatpush.bf16.msra.mxu0 0
  %179 = vmatpush.bf16.msra.mxu0 %v167
  %180 = vmatpush.bf16.msra.mxu0 %v166
  %181 = vmatpush.bf16.msra.mxu0 %v165
  %182 = vmatpush.bf16.msra.mxu0 %v164
  %183 = vmatmul.bf16.gmra.mxu0 %v173
  %v184 = vpop.f32.mrf.mxu0
  %v185 = vadd.f32 0.0, %v184
  %v186 = vpop.f32.mrf.mxu0
  %187 = vdwg.mxu0
  %v196 = vunpack.c.l.b16 %v130
  %v197 = vunpack.c.l.b16 %v131
  %v198 = vunpack.c.l.b16 %v132
  %v199 = vunpack.c.l.b16 %v133
  %v200 = vunpack.c.l.b16 %v134
  %v201 = vunpack.c.l.b16 %v135
  %v202 = vunpack.c.l.b16 %v136
  %v203 = vunpack.c.l.b16 %v137
  %v204 = vpack.c.b16 %v197, %v196
  %v205 = vpack.c.b16 %v199, %v198
  %v206 = vpack.c.b16 %v201, %v200
  %v207 = vpack.c.b16 %v203, %v202
  %v213 = vsel %vm65, %v138, 0
  %215 = vmatpush.bf16.msra.mxu0 0
  %216 = vmatpush.bf16.msra.mxu0 0
  %217 = vmatpush.bf16.msra.mxu0 0
  %218 = vmatpush.bf16.msra.mxu0 0
  %219 = vmatpush.bf16.msra.mxu0 %v207
  %220 = vmatpush.bf16.msra.mxu0 %v206
  %221 = vmatpush.bf16.msra.mxu0 %v205
  %222 = vmatpush.bf16.msra.mxu0 %v204
  %223 = vmatmul.bf16.gmra.mxu0 %v213
  %v224 = vpop.f32.mrf.mxu0
  %v225 = vadd.f32 %v185, %v224
  %v226 = vpop.f32.mrf.mxu0
  %227 = vdwg.mxu0
  %v228 = vld [vmem:[%s8] sm:$0x1]
  %v230 = vperm.slane %v228, 0
  %v232 = vadd.f32 %v225, %v230
  %v233 = vmul.f32 %v232, 0.5
  %v234 = vmul.f32 %v232, 0.70710677
  %v235 = vmul.f32 %v234, %v234
  %v236 = vmin.f32 16.0, %v235
  %v237 = vmul.f32 %v236, 2.1237322e-06
  %v238 = vadd.f32 %v237, 0.00028619796
  %v239 = vmul.f32 %v236, %v238
  %v240 = vadd.f32 %v239, 0.0036580483
  %v241 = vmul.f32 %v236, %v240
  %v242 = vadd.f32 %v241, 0.05243302
  %v243 = vmul.f32 %v236, %v242
  %v244 = vadd.f32 %v243, 0.18741608
  %v245 = vmul.f32 %v236, %v244
  %v246 = vadd.f32 %v245, 1.1283791
  %v247 = vmul.f32 %v234, %v246
  %v248 = vmul.f32 %v236, 3.8918573e-05
  %v249 = vadd.f32 %v248, 0.001143296
  %v250 = vmul.f32 %v236, %v249
  %v251 = vadd.f32 %v250, 0.014752088
  %v252 = vmul.f32 %v236, %v251
  %v253 = vadd.f32 %v252, 0.112945676
  %v254 = vmul.f32 %v236, %v253
  %v255 = vadd.f32 %v254, 0.4994258
  %v256 = vmul.f32 %v236, %v255
  %v257 = vadd.f32 %v256, 1.0
  %v258 = vrcp.pop %v257
  %v259 = vmul.f32 %v257, %v258
  %v260 = vsub.f32 1.0, %v259
  %v261 = vmul.f32 %v258, %v260
  %v262 = vadd.f32 %v258, %v261
  %vm263 = vweird.f32 %v257
  %vm264 = vweird.f32 %v258
  %vm265 = vmor %vm263, %vm264
  %v266 = vsel %vm265, %v258, %v262
  %v267 = vand.u32 2147483647, %v257
  %vm268 = vcmp.eq.f32.partialorder %v267, 8.507059e+37
  %v269 = vand.u32 %v257, 2147483648
  %v270 = vor.u32 1.1754944e-38, %v269
  %v271 = vsel %vm268, %v270, %v266
  %v272 = vmul.f32 %v247, %v271
  %v273 = vmin.f32 %v272, 1.0
  %v274 = vmax.f32 %v273, -1.0
  %v275 = vadd.f32 %v274, 1.0
  %v276 = vmul.f32 %v233, %v275
  %v277 = vld [vmem:[%s9] sm:$0xf]
  %v278 = vld [vmem:[%s9 + $0x4] sm:$0xf]
  %v279 = vld [vmem:[%s9 + $0x8] sm:$0xf]
  %v280 = vld [vmem:[%s9 + $0xc] sm:$0xf]
  %v281 = vld [vmem:[%s9 + $0x10] sm:$0xf]
  %v282 = vld [vmem:[%s9 + $0x14] sm:$0xf]
  %v283 = vld [vmem:[%s9 + $0x18] sm:$0xf]
  %v284 = vld [vmem:[%s9 + $0x1c] sm:$0xf]
  %v285 = vpack.c.bf16 %v276, %v276
  %v286 = vld [vmem:[%s10] sm:$0x1]
  %v288 = vperm.slane %v286, 0
  %v298 = vunpack.c.l.b16 %v277
  %v299 = vunpack.c.l.b16 %v278
  %v300 = vunpack.c.l.b16 %v279
  %v301 = vunpack.c.l.b16 %v280
  %v302 = vunpack.c.l.b16 %v281
  %v303 = vunpack.c.l.b16 %v282
  %v304 = vunpack.c.l.b16 %v283
  %v305 = vunpack.c.l.b16 %v284
  %v306 = vpack.c.b16 %v299, %v298
  %v307 = vpack.c.b16 %v301, %v300
  %v308 = vpack.c.b16 %v303, %v302
  %v309 = vpack.c.b16 %v305, %v304
  %v315 = vsel %vm65, %v285, 0
  %317 = vmatpush.bf16.msra.mxu0 0
  %318 = vmatpush.bf16.msra.mxu0 0
  %319 = vmatpush.bf16.msra.mxu0 0
  %320 = vmatpush.bf16.msra.mxu0 0
  %321 = vmatpush.bf16.msra.mxu0 %v309
  %322 = vmatpush.bf16.msra.mxu0 %v308
  %323 = vmatpush.bf16.msra.mxu0 %v307
  %324 = vmatpush.bf16.msra.mxu0 %v306
  %325 = vmatmul.bf16.gmra.mxu0 %v315
  %v326 = vpop.f32.mrf.mxu0
  %v327 = vadd.f32 %v288, %v326
  %v328 = vpop.f32.mrf.mxu0
  %329 = vdwg.mxu0
  %v330 = vadd.f32 %v327, %v63
  %v331 = vld [vmem:[%s11] sm:$0x1]
  %v332 = vld [vmem:[%s12] sm:$0x1]
  %v333 = vsel %vm65, %v330, 0.0
  %334 = vadd.xlane.f32.xlu0 %v333
  %v335 = vpop.xlane.xlu0 %334
  %v336 = vmul.f32 %v335, %v75
  %v337 = vsub.f32 %v330, %v336
  %v338 = vmul.f32 %v337, %v337
  %v339 = vsel %vm65, %v338, 0.0
  %340 = vadd.xlane.f32.xlu0 %v339
  %v341 = vpop.xlane.xlu0 %340
  %v342 = vmul.f32 %v341, %v75
  %v343 = vadd.f32 %v342, 1e-05
  %v344 = vrsqrt.pop %v343
  %v345 = vmul.f32 %v344, %v343
  %v346 = vmul.f32 %v345, %v344
  %v347 = vmul.f32 0.5, %v346
  %v348 = vsub.f32 1.5, %v347
  %v349 = vmul.f32 %v344, %v348
  %vm350 = vweird.f32 %v343
  %vm351 = vweird.f32 %v344
  %vm352 = vmor %vm350, %vm351
  %v353 = vsel %vm352, %v344, %v349
  %v354 = vmul.f32 %v337, %v353
  %v356 = vperm.slane %v331, 0
  %v358 = vmul.f32 %v354, %v356
  %v360 = vperm.slane %v332, 0
  %v362 = vadd.f32 %v358, %v360
  %v363 = vld [vmem:[%s13] sm:$0xf]
  %v364 = vld [vmem:[%s13 + $0x4] sm:$0xf]
  %v365 = vld [vmem:[%s13 + $0x8] sm:$0xf]
  %v366 = vld [vmem:[%s13 + $0xc] sm:$0xf]
  %v367 = vld [vmem:[%s13 + $0x10] sm:$0xf]
  %v368 = vld [vmem:[%s13 + $0x14] sm:$0xf]
  %v369 = vld [vmem:[%s13 + $0x18] sm:$0xf]
  %v370 = vld [vmem:[%s13 + $0x1c] sm:$0xf]
  %v371 = vpack.c.bf16 %v362, %v362
  %v372 = vld [vmem:[%s14] sm:$0x1]
  %v374 = vperm.slane %v372, 0
  %v384 = vunpack.c.l.b16 %v363
  %v385 = vunpack.c.l.b16 %v364
  %v386 = vunpack.c.l.b16 %v365
  %v387 = vunpack.c.l.b16 %v366
  %v388 = vunpack.c.l.b16 %v367
  %v389 = vunpack.c.l.b16 %v368
  %v390 = vunpack.c.l.b16 %v369
  %v391 = vunpack.c.l.b16 %v370
  %v392 = vpack.c.b16 %v385, %v384
  %v393 = vpack.c.b16 %v387, %v386
  %v394 = vpack.c.b16 %v389, %v388
  %v395 = vpack.c.b16 %v391, %v390
  %v401 = vsel %vm65, %v371, 0
  %403 = vmatpush.bf16.msra.mxu0 0
  %404 = vmatpush.bf16.msra.mxu0 0
  %405 = vmatpush.bf16.msra.mxu0 0
  %406 = vmatpush.bf16.msra.mxu0 0
  %407 = vmatpush.bf16.msra.mxu0 %v395
  %408 = vmatpush.bf16.msra.mxu0 %v394
  %409 = vmatpush.bf16.msra.mxu0 %v393
  %410 = vmatpush.bf16.msra.mxu0 %v392
  %411 = vmatmul.bf16.gmra.mxu0 %v401
  %v412 = vpop.f32.mrf.mxu0
  %v413 = vadd.f32 %v374, %v412
  %v414 = vpop.f32.mrf.mxu0
  %415 = vdwg.mxu0
  %v416 = vmul.f32 %v413, 0.5
  %v417 = vmul.f32 %v413, 0.70710677
  %v418 = vmul.f32 %v417, %v417
  %v419 = vmin.f32 16.0, %v418
  %v420 = vmul.f32 %v419, 2.1237322e-06
  %v421 = vadd.f32 %v420, 0.00028619796
  %v422 = vmul.f32 %v419, %v421
  %v423 = vadd.f32 %v422, 0.0036580483
  %v424 = vmul.f32 %v419, %v423
  %v425 = vadd.f32 %v424, 0.05243302
  %v426 = vmul.f32 %v419, %v425
  %v427 = vadd.f32 %v426, 0.18741608
  %v428 = vmul.f32 %v419, %v427
  %v429 = vadd.f32 %v428, 1.1283791
  %v430 = vmul.f32 %v417, %v429
  %v431 = vmul.f32 %v419, 3.8918573e-05
  %v432 = vadd.f32 %v431, 0.001143296
  %v433 = vmul.f32 %v419, %v432
  %v434 = vadd.f32 %v433, 0.014752088
  %v435 = vmul.f32 %v419, %v434
  %v436 = vadd.f32 %v435, 0.112945676
  %v437 = vmul.f32 %v419, %v436
  %v438 = vadd.f32 %v437, 0.4994258
  %v439 = vmul.f32 %v419, %v438
  %v440 = vadd.f32 %v439, 1.0
  %v441 = vrcp.pop %v440
  %v442 = vmul.f32 %v440, %v441
  %v443 = vsub.f32 1.0, %v442
  %v444 = vmul.f32 %v441, %v443
  %v445 = vadd.f32 %v441, %v444
  %vm446 = vweird.f32 %v440
  %vm447 = vweird.f32 %v441
  %vm448 = vmor %vm446, %vm447
  %v449 = vsel %vm448, %v441, %v445
  %v450 = vand.u32 2147483647, %v440
  %vm451 = vcmp.eq.f32.partialorder %v450, 8.507059e+37
  %v452 = vand.u32 %v440, 2147483648
  %v453 = vor.u32 1.1754944e-38, %v452
  %v454 = vsel %vm451, %v453, %v449
  %v455 = vmul.f32 %v430, %v454
  %v456 = vmin.f32 %v455, 1.0
  %v457 = vmax.f32 %v456, -1.0
  %v458 = vadd.f32 %v457, 1.0
  %v459 = vmul.f32 %v416, %v458
  %v460 = vld [vmem:[%s15] sm:$0xf]
  %v461 = vld [vmem:[%s15 + $0x4] sm:$0xf]
  %v462 = vld [vmem:[%s15 + $0x8] sm:$0xf]
  %v463 = vld [vmem:[%s15 + $0xc] sm:$0xf]
  %v464 = vld [vmem:[%s15 + $0x10] sm:$0xf]
  %v465 = vld [vmem:[%s15 + $0x14] sm:$0xf]
  %v466 = vld [vmem:[%s15 + $0x18] sm:$0xf]
  %v467 = vld [vmem:[%s15 + $0x1c] sm:$0xf]
  %v468 = vpack.c.bf16 %v459, %v459
  %v469 = vld [vmem:[%s16] sm:$0x1]
  %v471 = vperm.slane %v469, 0
  %v481 = vunpack.c.l.b16 %v460
  %v482 = vunpack.c.l.b16 %v461
  %v483 = vunpack.c.l.b16 %v462
  %v484 = vunpack.c.l.b16 %v463
  %v485 = vunpack.c.l.b16 %v464
  %v486 = vunpack.c.l.b16 %v465
  %v487 = vunpack.c.l.b16 %v466
  %v488 = vunpack.c.l.b16 %v467
  %v489 = vpack.c.b16 %v482, %v481
  %v490 = vpack.c.b16 %v484, %v483
  %v491 = vpack.c.b16 %v486, %v485
  %v492 = vpack.c.b16 %v488, %v487
  %v498 = vsel %vm65, %v468, 0
  %500 = vmatpush.bf16.msra.mxu0 0
  %501 = vmatpush.bf16.msra.mxu0 0
  %502 = vmatpush.bf16.msra.mxu0 0
  %503 = vmatpush.bf16.msra.mxu0 0
  %504 = vmatpush.bf16.msra.mxu0 %v492
  %505 = vmatpush.bf16.msra.mxu0 %v491
  %506 = vmatpush.bf16.msra.mxu0 %v490
  %507 = vmatpush.bf16.msra.mxu0 %v489
  %508 = vmatmul.bf16.gmra.mxu0 %v498
  %v509 = vpop.f32.mrf.mxu0
  %v510 = vadd.f32 %v471, %v509
  %v511 = vpop.f32.mrf.mxu0
  %512 = vdwg.mxu0
  %v513 = vadd.f32 %v510, %v330
  %v514 = vld [vmem:[%s17] sm:$0x1]
  %v515 = vld [vmem:[%s18] sm:$0x1]
  %v516 = vsel %vm65, %v513, 0.0
  %517 = vadd.xlane.f32.xlu0 %v516
  %v518 = vpop.xlane.xlu0 %517
  %v519 = vmul.f32 %v518, %v75
  %v520 = vsub.f32 %v513, %v519
  %v521 = vmul.f32 %v520, %v520
  %v522 = vsel %vm65, %v521, 0.0
  %523 = vadd.xlane.f32.xlu0 %v522
  %v524 = vpop.xlane.xlu0 %523
  %v525 = vmul.f32 %v524, %v75
  %v526 = vadd.f32 %v525, 1e-05
  %v527 = vrsqrt.pop %v526
  %v528 = vmul.f32 %v527, %v526
  %v529 = vmul.f32 %v528, %v527
  %v530 = vmul.f32 0.5, %v529
  %v531 = vsub.f32 1.5, %v530
  %v532 = vmul.f32 %v527, %v531
  %vm533 = vweird.f32 %v526
  %vm534 = vweird.f32 %v527
  %vm535 = vmor %vm533, %vm534
  %v536 = vsel %vm535, %v527, %v532
  %v537 = vmul.f32 %v520, %v536
  %v539 = vperm.slane %v514, 0
  %v541 = vmul.f32 %v537, %v539
  %v543 = vperm.slane %v515, 0
  %v545 = vadd.f32 %v541, %v543
  %546 = vst.msk [vmem:[%s19] sm:$0xff] %vm65, %v545
  // Predicated region
  $region78: #{_forward_impl.2} parent=0 // pred_check
    _
  $region79: #{_forward_impl.2} parent=0 // pred_check_branch
    %548 = sbr.rel (0) target = $region81
  $region80: #{_forward_impl.2} parent=0 // pred_region
    _
  $region81: #{_forward_impl.2} parent=0 // pred_fallthru
    _
  // Predicated region
  $region82: #{_forward_impl.2} parent=0 // pred_check
    _
  $region83: #{_forward_impl.2} parent=0 // pred_check_branch
    %550 = sbr.rel (0) target = $region85
  $region84: #{_forward_impl.2} parent=0 // pred_region
    _
  $region85: #{_forward_impl.2} parent=0 // pred_fallthru
    _

</llo_original>
